<compile_context>
chip_gen: v7x
topology: tpu7x:2x2x1
jax: 0.10.0
libtpu: 0.0.40
codegen_flags: <defaults>
</compile_context>

<pallas_src>
import jax
import jax.numpy as jnp
from jax.experimental import pallas as pl
from jax.experimental.pallas import tpu as pltpu


# --------------------------- static graph schema -----------------------------

NTYPES = {"user": 5, "item": 7}
NTYPE_LIST = list(NTYPES.keys())
CANONICAL_ETYPES = [
    ("user", "follows", "user"),
    ("user", "clicks", "item"),
    ("item", "clicked-by", "user"),
]
REL_NAMES = [r for _, r, _ in CANONICAL_ETYPES]

NU, NI = NTYPES["user"], NTYPES["item"]
NP = 8                 # node-block row padding (sublane tile)
IN_DIM = 8
HIDDEN = 32
N_CLASSES = 3
LANE = 128             # lane padding for hidden / class dims

# weight-slab row offsets (all blocks sublane-aligned)
W1_F, W1_CB, W1_C = 0, 8, 16            # [IN_DIM, LANE] each; rows 0:16 == vstack(W1_f, W1_cb)
W2_F, W2_CB, W2_C = 24, 152, 280        # [LANE, LANE] each (true data in [0:32, 0:32])
WCT = 408                               # [LANE, LANE]  (Wc^T, true data in [0:32, 0:3])
W_ROWS = 536


# ------------------------------ fused Pallas kernel --------------------------

def _fused_kernel(data_ref, w_ref, b_ref, o_ref):
    """Whole HeteroClassifier forward in one kernel (bf16 MXU ops, f32 accumulation)."""
    f32, bf16 = jnp.float32, jnp.bfloat16

    # ---- unpack graph slab (static views; padded rows/cols are zero) ----
    a_user_p = data_ref[0:NP, 0:2 * NP]           # [8,16]  [A_follows | A_clicked-by], padded dst rows
    a_user   = data_ref[0:NU, 0:2 * NP]           # [5,16]  true dst rows
    a_item_p = data_ref[NP:2 * NP, 0:NP]          # [8,8]   A_clicks, padded dst rows
    a_item   = data_ref[NP:NP + NI, 0:NP]         # [7,8]   true dst rows
    x_bd     = data_ref[2 * NP:4 * NP, 0:2 * NP]  # [16,16] blockdiag(X_user, X_item)
    x_user_p = data_ref[2 * NP:3 * NP, 0:IN_DIM]  # [8,8]   X_user (padded rows zero)

    # ---- biases (f32, pre-summed per dst ntype; padded lanes are zero) ----
    b1_u = b_ref[0:1, :]
    b1_i = b_ref[1:2, :]
    b2_u = b_ref[2:3, :]
    b2_i = b_ref[3:4, :]
    bc   = b_ref[4:5, :]

    # ---- layer 1: (A_hat @ X) @ W  (contract over IN_DIM=8 < HIDDEN=32) ----
    # dst=user: block-diag X makes A_user_cat @ X_bd == [A_f@X_u | A_cb@X_i];
    # the vstacked W1 matmul then fuses the relation sum into one MXU contraction.
    ax_u = jnp.dot(a_user_p, x_bd, preferred_element_type=f32).astype(bf16)          # [8,16]
    h1_u = jnp.maximum(
        jnp.dot(ax_u, w_ref[W1_F:W1_F + 2 * IN_DIM, :], preferred_element_type=f32) + b1_u,
        0.0)                                                                          # [8,128] f32
    # dst=item (single relation "clicks"): padded dst row stays harmless downstream.
    ax_i = jnp.dot(a_item_p, x_user_p, preferred_element_type=f32).astype(bf16)      # [8,8]
    h1_i = jnp.maximum(
        jnp.dot(ax_i, w_ref[W1_C:W1_C + IN_DIM, :], preferred_element_type=f32) + b1_i,
        0.0)                                                                          # [8,128] f32

    h1_u_bf = h1_u.astype(bf16)
    h1_i_bf = h1_i.astype(bf16)

    # ---- layer 2: X @ W per relation; relation sum fused into one A contraction per dst ----
    xw_fol = jnp.dot(h1_u_bf, w_ref[W2_F:W2_F + LANE, :], preferred_element_type=f32)    # [8,128]
    xw_cb  = jnp.dot(h1_i_bf, w_ref[W2_CB:W2_CB + LANE, :], preferred_element_type=f32)  # [8,128]
    # concat in f32 (8-row sublane tile -> aligned), then downcast for the MXU.
    xw_u = jnp.concatenate([xw_fol, xw_cb], axis=0).astype(bf16)                         # [16,128]
    h2_u = jnp.dot(a_user, xw_u, preferred_element_type=f32) + b2_u                      # [5,128]

    xw_clk = jnp.dot(h1_u_bf, w_ref[W2_C:W2_C + LANE, :],
                     preferred_element_type=f32).astype(bf16)                            # [8,128]
    h2_i = jnp.dot(a_item, xw_clk, preferred_element_type=f32) + b2_i                    # [7,128]

    # ---- readout (sum_nodes over all ntypes) + classify (lane-dense [1,128] output) ----
    hg = (jnp.sum(h2_u, axis=0, keepdims=True)
          + jnp.sum(h2_i, axis=0, keepdims=True))                                        # [1,128]
    o_ref[...] = (jnp.dot(hg.astype(bf16), w_ref[WCT:WCT + LANE, :],
                          preferred_element_type=f32) + bc)


def hetero_classifier_forward(graph_slab, weight_slab, bias_slab):
    """Single gridless pallas_call; 3 input slabs + 1 lane-dense output."""
    logits_pad = pl.pallas_call(
        _fused_kernel,
        out_shape=jax.ShapeDtypeStruct((1, LANE), jnp.float32),
        in_specs=[pl.BlockSpec(memory_space=pltpu.MemorySpace.VMEM)] * 3,
        out_specs=pl.BlockSpec(memory_space=pltpu.MemorySpace.VMEM),
    )(graph_slab, weight_slab, bias_slab)
    return logits_pad[:, :N_CLASSES]


# ----------------------------- packing (host, one-time) ----------------------

def normalize_adj(a):
    # DGL GraphConv norm='both': A_hat[v,u] = A[v,u] / sqrt(d_out(u) * d_in(v))
    d_in = jnp.maximum(jnp.sum(a, axis=1, keepdims=True), 1.0)   # [N_dst, 1]
    d_out = jnp.maximum(jnp.sum(a, axis=0, keepdims=True), 1.0)  # [1, N_src]
    return a * jax.lax.rsqrt(d_in) * jax.lax.rsqrt(d_out)


def pack_graph_slab(a_hats, feats):
    """[32,128] bf16: padded per-dst A blocks + block-diagonal node features."""
    s = jnp.zeros((4 * NP, LANE), jnp.float32)
    s = s.at[0:NU, 0:NU].set(a_hats["follows"])                          # dst user <- src user
    s = s.at[0:NU, NP:NP + NI].set(a_hats["clicked-by"])                 # dst user <- src item
    s = s.at[NP:NP + NI, 0:NU].set(a_hats["clicks"])                     # dst item <- src user
    s = s.at[2 * NP:2 * NP + NU, 0:IN_DIM].set(feats["user"])            # X blockdiag: user block
    s = s.at[3 * NP:3 * NP + NI, IN_DIM:2 * IN_DIM].set(feats["item"])   # X blockdiag: item block
    return s.astype(jnp.bfloat16)


def pack_weight_slab(params):
    """[536,128] bf16: all layer / classifier weights, zero-padded to 128 lanes."""
    s = jnp.zeros((W_ROWS, LANE), jnp.float32)
    s = s.at[W1_F:W1_F + IN_DIM, 0:HIDDEN].set(params["layer1"]["follows"]["w"])
    s = s.at[W1_CB:W1_CB + IN_DIM, 0:HIDDEN].set(params["layer1"]["clicked-by"]["w"])
    s = s.at[W1_C:W1_C + IN_DIM, 0:HIDDEN].set(params["layer1"]["clicks"]["w"])
    s = s.at[W2_F:W2_F + HIDDEN, 0:HIDDEN].set(params["layer2"]["follows"]["w"])
    s = s.at[W2_CB:W2_CB + HIDDEN, 0:HIDDEN].set(params["layer2"]["clicked-by"]["w"])
    s = s.at[W2_C:W2_C + HIDDEN, 0:HIDDEN].set(params["layer2"]["clicks"]["w"])
    s = s.at[WCT:WCT + HIDDEN, 0:N_CLASSES].set(params["classify"]["w"].T)
    return s.astype(jnp.bfloat16)


def pack_bias_slab(params):
    """[8,128] f32: per-dst pre-summed biases + classifier bias (padded lanes stay 0)."""
    s = jnp.zeros((8, LANE), jnp.float32)
    s = s.at[0, 0:HIDDEN].set(params["layer1"]["follows"]["b"] + params["layer1"]["clicked-by"]["b"])
    s = s.at[1, 0:HIDDEN].set(params["layer1"]["clicks"]["b"])
    s = s.at[2, 0:HIDDEN].set(params["layer2"]["follows"]["b"] + params["layer2"]["clicked-by"]["b"])
    s = s.at[3, 0:HIDDEN].set(params["layer2"]["clicks"]["b"])
    s = s.at[4, 0:N_CLASSES].set(params["classify"]["b"])
    return s


# ----------------------------- params & reference ----------------------------

def init_params(key):
    keys = iter(jax.random.split(key, 16))
    params = {"layer1": {}, "layer2": {}}
    for rel in REL_NAMES:
        params["layer1"][rel] = {
            "w": 0.1 * jax.random.normal(next(keys), (IN_DIM, HIDDEN), jnp.float32),
            "b": 0.1 * jax.random.normal(next(keys), (HIDDEN,), jnp.float32),
        }
        params["layer2"][rel] = {
            "w": 0.1 * jax.random.normal(next(keys), (HIDDEN, HIDDEN), jnp.float32),
            "b": 0.1 * jax.random.normal(next(keys), (HIDDEN,), jnp.float32),
        }
    params["classify"] = {
        "w": 0.1 * jax.random.normal(next(keys), (N_CLASSES, HIDDEN), jnp.float32),
        "b": 0.1 * jax.random.normal(next(keys), (N_CLASSES,), jnp.float32),
    }
    return params


def reference_forward(a_hats, feats, params):
    # Pure-JAX f32 reference of the original per-relation semantics (sanity check).
    def layer(x, lp, relu):
        h = {}
        for (src, rel, dst) in CANONICAL_ETYPES:
            msg = a_hats[rel] @ (x[src] @ lp[rel]["w"]) + lp[rel]["b"]
            h[dst] = msg if dst not in h else h[dst] + msg
        if relu:
            h = {k: jnp.maximum(v, 0.0) for k, v in h.items()}
        return h

    h1 = layer(feats, params["layer1"], True)
    h2 = layer(h1, params["layer2"], False)
    hg = sum(jnp.sum(h2[nt], axis=0, keepdims=True) for nt in NTYPE_LIST)
    return hg @ params["classify"]["w"].T + params["classify"]["b"]


# --------------------------------- driver -----------------------------------

if __name__ == "__main__":
    key = jax.random.PRNGKey(0)
    k_graph, k_feat, k_param = jax.random.split(key, 3)

    # Deterministic synthetic heterogeneous graph (dense normalized adjacency per relation).
    gkeys = jax.random.split(k_graph, len(CANONICAL_ETYPES))
    a_hats = {}
    for gk, (src, rel, dst) in zip(gkeys, CANONICAL_ETYPES):
        a = (jax.random.uniform(gk, (NTYPES[dst], NTYPES[src])) > 0.5).astype(jnp.float32)
        a_hats[rel] = normalize_adj(a)

    # Node features per ntype: [num_nodes, in_dim]
    fkeys = jax.random.split(k_feat, len(NTYPES))
    feats = {
        nt: jax.random.normal(fk, (n, IN_DIM), jnp.float32)
        for fk, (nt, n) in zip(fkeys, NTYPES.items())
    }

    params = init_params(k_param)

    # One-time packing into lane-dense slabs (not per forward call).
    graph_slab = pack_graph_slab(a_hats, feats)
    weight_slab = pack_weight_slab(params)
    bias_slab = pack_bias_slab(params)

    logits = hetero_classifier_forward(graph_slab, weight_slab, bias_slab)
    jax.block_until_ready(logits)
    assert logits.shape == (1, N_CLASSES)

    ref = reference_forward(a_hats, feats, params)
    # bf16 MXU operands (f32 accumulation) vs f32 reference -> 2e-2 tolerance.
    assert jnp.allclose(logits, ref, rtol=2e-2, atol=2e-2), (logits, ref)

    print("KERNEL_OK")
</pallas_src>

<mosaic_0001>
module attributes {stable_mosaic.version = 11 : i64} {
  func.func @_fused_kernel(%arg0: memref<32x128xbf16, #tpu.memory_space<vmem>>, %arg1: memref<536x128xbf16, #tpu.memory_space<vmem>>, %arg2: memref<8x128xf32, #tpu.memory_space<vmem>>, %arg3: memref<1x128xf32, #tpu.memory_space<vmem>>) attributes {dimension_semantics = [], scalar_prefetch = 0 : i64, scratch_operands = 0 : i64, tpu.core_type = #tpu.core_type<tc>} {
    %c0 = arith.constant 0 : index
    %c0_0 = arith.constant 0 : index
    %0 = vector.load %arg0[%c0, %c0_0] : memref<32x128xbf16, #tpu.memory_space<vmem>>, vector<8x16xbf16>
    %c0_1 = arith.constant 0 : index
    %c0_2 = arith.constant 0 : index
    %1 = vector.load %arg0[%c0_1, %c0_2] : memref<32x128xbf16, #tpu.memory_space<vmem>>, vector<5x16xbf16>
    %c8 = arith.constant 8 : index
    %c0_3 = arith.constant 0 : index
    %2 = vector.load %arg0[%c8, %c0_3] : memref<32x128xbf16, #tpu.memory_space<vmem>>, vector<8x8xbf16>
    %c8_4 = arith.constant 8 : index
    %c0_5 = arith.constant 0 : index
    %3 = vector.load %arg0[%c8_4, %c0_5] : memref<32x128xbf16, #tpu.memory_space<vmem>>, vector<7x8xbf16>
    %c16 = arith.constant 16 : index
    %c0_6 = arith.constant 0 : index
    %4 = vector.load %arg0[%c16, %c0_6] : memref<32x128xbf16, #tpu.memory_space<vmem>>, vector<16x16xbf16>
    %c16_7 = arith.constant 16 : index
    %c0_8 = arith.constant 0 : index
    %5 = vector.load %arg0[%c16_7, %c0_8] : memref<32x128xbf16, #tpu.memory_space<vmem>>, vector<8x8xbf16>
    %c0_9 = arith.constant 0 : index
    %c0_10 = arith.constant 0 : index
    %6 = vector.load %arg2[%c0_9, %c0_10] : memref<8x128xf32, #tpu.memory_space<vmem>>, vector<1x128xf32>
    %c1 = arith.constant 1 : index
    %c0_11 = arith.constant 0 : index
    %7 = vector.load %arg2[%c1, %c0_11] : memref<8x128xf32, #tpu.memory_space<vmem>>, vector<1x128xf32>
    %c2 = arith.constant 2 : index
    %c0_12 = arith.constant 0 : index
    %8 = vector.load %arg2[%c2, %c0_12] : memref<8x128xf32, #tpu.memory_space<vmem>>, vector<1x128xf32>
    %c3 = arith.constant 3 : index
    %c0_13 = arith.constant 0 : index
    %9 = vector.load %arg2[%c3, %c0_13] : memref<8x128xf32, #tpu.memory_space<vmem>>, vector<1x128xf32>
    %c4 = arith.constant 4 : index
    %c0_14 = arith.constant 0 : index
    %10 = vector.load %arg2[%c4, %c0_14] : memref<8x128xf32, #tpu.memory_space<vmem>>, vector<1x128xf32>
    %cst = arith.constant dense<0.000000e+00> : vector<8x16xf32>
    %11 = tpu.matmul %0, %4, %cst {dimension_numbers = #tpu.dot_dimension_numbers<[1], [0], [0], [1], [0, 0, 1, 1], [], []>} : vector<8x16xbf16>, vector<16x16xbf16>, vector<8x16xf32> -> vector<8x16xf32>
    %12 = arith.truncf %11 : vector<8x16xf32> to vector<8x16xbf16>
    %c0_15 = arith.constant 0 : index
    %c0_16 = arith.constant 0 : index
    %13 = vector.load %arg1[%c0_15, %c0_16] : memref<536x128xbf16, #tpu.memory_space<vmem>>, vector<16x128xbf16>
    %cst_17 = arith.constant dense<0.000000e+00> : vector<8x128xf32>
    %14 = tpu.matmul %12, %13, %cst_17 {dimension_numbers = #tpu.dot_dimension_numbers<[1], [0], [0], [1], [0, 0, 1, 1], [], []>} : vector<8x16xbf16>, vector<16x128xbf16>, vector<8x128xf32> -> vector<8x128xf32>
    %15 = vector.broadcast %6 : vector<1x128xf32> to vector<8x128xf32>
    %16 = arith.addf %14, %15 : vector<8x128xf32>
    %cst_18 = arith.constant 0.000000e+00 : f32
    %17 = vector.broadcast %cst_18 : f32 to vector<8x128xf32>
    %18 = arith.maximumf %16, %17 : vector<8x128xf32>
    %cst_19 = arith.constant dense<0.000000e+00> : vector<8x8xf32>
    %19 = tpu.matmul %2, %5, %cst_19 {dimension_numbers = #tpu.dot_dimension_numbers<[1], [0], [0], [1], [0, 0, 1, 1], [], []>} : vector<8x8xbf16>, vector<8x8xbf16>, vector<8x8xf32> -> vector<8x8xf32>
    %20 = arith.truncf %19 : vector<8x8xf32> to vector<8x8xbf16>
    %c16_20 = arith.constant 16 : index
    %c0_21 = arith.constant 0 : index
    %21 = vector.load %arg1[%c16_20, %c0_21] : memref<536x128xbf16, #tpu.memory_space<vmem>>, vector<8x128xbf16>
    %cst_22 = arith.constant dense<0.000000e+00> : vector<8x128xf32>
    %22 = tpu.matmul %20, %21, %cst_22 {dimension_numbers = #tpu.dot_dimension_numbers<[1], [0], [0], [1], [0, 0, 1, 1], [], []>} : vector<8x8xbf16>, vector<8x128xbf16>, vector<8x128xf32> -> vector<8x128xf32>
    %23 = vector.broadcast %7 : vector<1x128xf32> to vector<8x128xf32>
    %24 = arith.addf %22, %23 : vector<8x128xf32>
    %cst_23 = arith.constant 0.000000e+00 : f32
    %25 = vector.broadcast %cst_23 : f32 to vector<8x128xf32>
    %26 = arith.maximumf %24, %25 : vector<8x128xf32>
    %27 = arith.truncf %18 : vector<8x128xf32> to vector<8x128xbf16>
    %28 = arith.truncf %26 : vector<8x128xf32> to vector<8x128xbf16>
    %c24 = arith.constant 24 : index
    %c0_24 = arith.constant 0 : index
    %29 = vector.load %arg1[%c24, %c0_24] : memref<536x128xbf16, #tpu.memory_space<vmem>>, vector<128x128xbf16>
    %cst_25 = arith.constant dense<0.000000e+00> : vector<8x128xf32>
    %30 = tpu.matmul %27, %29, %cst_25 {dimension_numbers = #tpu.dot_dimension_numbers<[1], [0], [0], [1], [0, 0, 1, 1], [], []>} : vector<8x128xbf16>, vector<128x128xbf16>, vector<8x128xf32> -> vector<8x128xf32>
    %c152 = arith.constant 152 : index
    %c0_26 = arith.constant 0 : index
    %31 = vector.load %arg1[%c152, %c0_26] : memref<536x128xbf16, #tpu.memory_space<vmem>>, vector<128x128xbf16>
    %cst_27 = arith.constant dense<0.000000e+00> : vector<8x128xf32>
    %32 = tpu.matmul %28, %31, %cst_27 {dimension_numbers = #tpu.dot_dimension_numbers<[1], [0], [0], [1], [0, 0, 1, 1], [], []>} : vector<8x128xbf16>, vector<128x128xbf16>, vector<8x128xf32> -> vector<8x128xf32>
    %33 = tpu.concatenate %30, %32 in 0 : vector<8x128xf32>, vector<8x128xf32> -> vector<16x128xf32>
    %34 = arith.truncf %33 : vector<16x128xf32> to vector<16x128xbf16>
    %cst_28 = arith.constant dense<0.000000e+00> : vector<5x128xf32>
    %35 = tpu.matmul %1, %34, %cst_28 {dimension_numbers = #tpu.dot_dimension_numbers<[1], [0], [0], [1], [0, 0, 1, 1], [], []>} : vector<5x16xbf16>, vector<16x128xbf16>, vector<5x128xf32> -> vector<5x128xf32>
    %36 = vector.broadcast %8 : vector<1x128xf32> to vector<5x128xf32>
    %37 = arith.addf %35, %36 : vector<5x128xf32>
    %c280 = arith.constant 280 : index
    %c0_29 = arith.constant 0 : index
    %38 = vector.load %arg1[%c280, %c0_29] : memref<536x128xbf16, #tpu.memory_space<vmem>>, vector<128x128xbf16>
    %cst_30 = arith.constant dense<0.000000e+00> : vector<8x128xf32>
    %39 = tpu.matmul %27, %38, %cst_30 {dimension_numbers = #tpu.dot_dimension_numbers<[1], [0], [0], [1], [0, 0, 1, 1], [], []>} : vector<8x128xbf16>, vector<128x128xbf16>, vector<8x128xf32> -> vector<8x128xf32>
    %40 = arith.truncf %39 : vector<8x128xf32> to vector<8x128xbf16>
    %cst_31 = arith.constant dense<0.000000e+00> : vector<7x128xf32>
    %41 = tpu.matmul %3, %40, %cst_31 {dimension_numbers = #tpu.dot_dimension_numbers<[1], [0], [0], [1], [0, 0, 1, 1], [], []>} : vector<7x8xbf16>, vector<8x128xbf16>, vector<7x128xf32> -> vector<7x128xf32>
    %42 = vector.broadcast %9 : vector<1x128xf32> to vector<7x128xf32>
    %43 = arith.addf %41, %42 : vector<7x128xf32>
    %cst_32 = arith.constant dense<0.000000e+00> : vector<128xf32>
    %44 = vector.multi_reduction <add>, %37, %cst_32 [0] : vector<5x128xf32> to vector<128xf32>
    %45 = vector.shape_cast %44 : vector<128xf32> to vector<1x128xf32>
    %cst_33 = arith.constant dense<0.000000e+00> : vector<128xf32>
    %46 = vector.multi_reduction <add>, %43, %cst_33 [0] : vector<7x128xf32> to vector<128xf32>
    %47 = vector.shape_cast %46 : vector<128xf32> to vector<1x128xf32>
    %48 = arith.addf %45, %47 : vector<1x128xf32>
    %49 = arith.truncf %48 : vector<1x128xf32> to vector<1x128xbf16>
    %c408 = arith.constant 408 : index
    %c0_34 = arith.constant 0 : index
    %50 = vector.load %arg1[%c408, %c0_34] : memref<536x128xbf16, #tpu.memory_space<vmem>>, vector<128x128xbf16>
    %cst_35 = arith.constant dense<0.000000e+00> : vector<1x128xf32>
    %51 = tpu.matmul %49, %50, %cst_35 {dimension_numbers = #tpu.dot_dimension_numbers<[1], [0], [0], [1], [0, 0, 1, 1], [], []>} : vector<1x128xbf16>, vector<128x128xbf16>, vector<1x128xf32> -> vector<1x128xf32>
    %52 = arith.addf %51, %10 : vector<1x128xf32>
    %c0_36 = arith.constant 0 : index
    %c0_37 = arith.constant 0 : index
    %53 = vector.load %arg3[%c0_36, %c0_37] : memref<1x128xf32, #tpu.memory_space<vmem>>, vector<1x128xf32>
    tpu.vector_store %arg3[%c0_36, %c0_37], %52 {strides = array<i32>} : memref<1x128xf32, #tpu.memory_space<vmem>>, vector<1x128xf32>,
    return
  }
}

</mosaic_0001>

<llo_original>
// kernel: tpu_custom_call.1
$region0: #{tpu_custom_call.1}
  #allocation0 [shape = 'u32[]', space=smem, size = 0x4, offset = 0x4, fixed_abs, tag = 'smem constant byte address 0x4 - core index']
  #allocation1 [shape = 'u32[144,128]{1,0:T(1,128)}', space=vmem, size = 0x12000, scoped, tag = 'internal scratch']
  %s0 = inlined_call_operand.hbm [shape: bf16[32,128], index: 0, kind: input, shape index: {}]
  %s1 = inlined_call_operand.hbm [shape: bf16[536,128], index: 1, kind: input, shape index: {}]
  %s2 = inlined_call_operand.hbm [shape: f32[8,128], index: 2, kind: input, shape index: {}]
  %s3 = inlined_call_operand.hbm [shape: f32[1,128], index: 3, kind: output, shape index: {}]
  %s4 = sld [smem:[#allocation0]]
  $region34: #{tpu_custom_call.1} parent=0
    _
  %s6 = ssub.s32 1, %s4
  %s7 = scalar_select 0, %s6, %s4
  $region1: #{tpu_custom_call.1} parent=0
    #allocation2 [shape = 'u8[8192]{0}', space=vmem, size = 0x2000, scoped, tag = 'input window, operand 0, single buffered']
    #allocation3 [shape = 's32[1]{0}', space=sflag, size = 0x4, scoped, tag = 'scoped memory for tpu_custom_call.1']
    #allocation4 [shape = 's32[1]{0}', space=sflag, size = 0x4, scoped, tag = 'scoped memory for tpu_custom_call.1']
    #allocation5 [shape = 'u8[137216]{0}', space=vmem, size = 0x21800, scoped, tag = 'input window, operand 1, single buffered']
    #allocation6 [shape = 's32[1]{0}', space=sflag, size = 0x4, scoped, tag = 'scoped memory for tpu_custom_call.1']
    #allocation7 [shape = 'u8[4096]{0}', space=vmem, size = 0x1000, scoped, tag = 'input window, operand 2, single buffered']
    #allocation8 [shape = 'u8[512]{0}', space=vmem, size = 0x400, scoped, tag = 'output window, operand 0, single buffered']
    %8 = vsyncpa [#allocation3], 0
    %9 = vsyncpa [#allocation6], 0
    %10 = vsyncpa [#allocation4], 0
    // Predicated region
    $region2: #{tpu_custom_call.1} parent=1 // pred_check
      _
    $region3: #{tpu_custom_call.1} parent=1 // pred_check_branch
      %12 = sbr.rel (0) target = $region5
    $region4: #{tpu_custom_call.1} parent=1 // pred_region
      %s14 = ssub.s32 256, 256
      %15 = vsyncadd [#allocation3], %s14
      %s16 = sshll.u32 [#allocation2], 4
      %s17 = int_to_ptr.vmem [resolvable:$true] %s16
      %22 = dma.hbm_to_vmem [thread:$0]  %s0, 256, %s17, [#allocation3], 64, 64, 4
    $region5: #{tpu_custom_call.1} parent=1 // pred_fallthru
      _
    // Predicated region
    $region6: #{tpu_custom_call.1} parent=1 // pred_check
      _
    $region7: #{tpu_custom_call.1} parent=1 // pred_check_branch
      %24 = sbr.rel (0) target = $region9
    $region8: #{tpu_custom_call.1} parent=1 // pred_region
      %s26 = ssub.s32 4288, 4288
      %27 = vsyncadd [#allocation6], %s26
      %s28 = sshll.u32 [#allocation5], 4
      %s29 = int_to_ptr.vmem [resolvable:$true] %s28
      %34 = dma.hbm_to_vmem [thread:$0]  %s1, 4288, %s29, [#allocation6], 64, 64, 4
    $region9: #{tpu_custom_call.1} parent=1 // pred_fallthru
      _
    // Predicated region
    $region10: #{tpu_custom_call.1} parent=1 // pred_check
      _
    $region11: #{tpu_custom_call.1} parent=1 // pred_check_branch
      %36 = sbr.rel (0) target = $region13
    $region12: #{tpu_custom_call.1} parent=1 // pred_region
      %s38 = ssub.s32 128, 128
      %39 = vsyncadd [#allocation6], %s38
      %s41 = sshll.u32 [#allocation7], 4
      %s42 = int_to_ptr.vmem [resolvable:$true] %s41
      %44 = dma.hbm_to_vmem [thread:$0]  %s2, 128, %s42, [#allocation6]
    $region13: #{tpu_custom_call.1} parent=1 // pred_fallthru
      _
    // Predicated region
    $region14: #{tpu_custom_call.1} parent=1 // pred_check
      _
    $region15: #{tpu_custom_call.1} parent=1 // pred_check_branch
      %46 = sbr.rel (0) target = $region17
    $region16: #{tpu_custom_call.1} parent=1 // pred_region
      %47 = dma.done [#allocation3], 256
    $region17: #{tpu_custom_call.1} parent=1 // pred_fallthru
      _
    // Predicated region
    $region18: #{tpu_custom_call.1} parent=1 // pred_check
      _
    $region19: #{tpu_custom_call.1} parent=1 // pred_check_branch
      %49 = sbr.rel (0) target = $region21
    $region20: #{tpu_custom_call.1} parent=1 // pred_region
      %50 = dma.done [#allocation6], 4288
    $region21: #{tpu_custom_call.1} parent=1 // pred_fallthru
      _
    // Predicated region
    $region22: #{tpu_custom_call.1} parent=1 // pred_check
      _
    $region23: #{tpu_custom_call.1} parent=1 // pred_check_branch
      %52 = sbr.rel (0) target = $region25
    $region24: #{tpu_custom_call.1} parent=1 // pred_region
      %53 = dma.done [#allocation6], 128
    $region25: #{tpu_custom_call.1} parent=1 // pred_fallthru
      _
    %v55 = vld [vmem:[#allocation2] sm:$0xf]
    %v56 = vld [vmem:[#allocation2] sm:$0x7]
    %v57 = vld [vmem:[#allocation2 + $0x4] sm:$0xf]
    %v58 = vld [vmem:[#allocation2 + $0x8] sm:$0xf]
    %v59 = vld [vmem:[#allocation2 + $0xc] sm:$0xf]
    %v60 = vld [vmem:[#allocation2 + $0x8] sm:$0xf]
    %v61 = vld [vmem:[#allocation7] sm:$0x1]
    %v62 = vld [vmem:[#allocation7 + $0x1] sm:$0x1]
    %v63 = vld [vmem:[#allocation7 + $0x2] sm:$0x1]
    %v64 = vld [vmem:[#allocation7 + $0x3] sm:$0x1]
    %v65 = vld [vmem:[#allocation7 + $0x4] sm:$0x1]
    %v68 = vunpack.c.l.b16 %v58
    %v69 = vunpack.c.l.b16 %v59
    %v70 = vpack.c.b16 %v69, %v68
    %vm72 = vcmask 130048
    %v74 = vsel %vm72, %v55, 0
    %76 = vmatprep.subr.bf16.mxu0 0
    %77 = vmatpush1.bf16.msra.mxu0 %v70
    %78 = vmatprep.subr.bf16.mxu0 0
    %79 = vmatpush1.bf16.msra.mxu0 0
    %80 = vmatprep.subr.bf16.mxu0 0
    %81 = vmatpush1.bf16.msra.mxu0 0
    %82 = vmatprep.subr.bf16.mxu0 0
    %83 = vmatpush1.bf16.msra.mxu0 0
    %84 = vmatprep.subr.bf16.mxu0 0
    %85 = vmatpush1.bf16.msra.mxu0 0
    %86 = vmatprep.subr.bf16.mxu0 0
    %87 = vmatpush1.bf16.msra.mxu0 0
    %88 = vmatprep.subr.bf16.mxu0 0
    %89 = vmatpush1.bf16.msra.mxu0 0
    %90 = vmatprep.subr.bf16.mxu0 0
    %91 = vmatpush1.bf16.msra.mxu0 0
    %92 = vmatprep.subr.bf16.mxu0 0
    %93 = vmatpush1.bf16.msra.mxu0 0
    %94 = vmatprep.subr.bf16.mxu0 0
    %95 = vmatpush1.bf16.msra.mxu0 0
    %96 = vmatprep.subr.bf16.mxu0 0
    %97 = vmatpush1.bf16.msra.mxu0 0
    %98 = vmatprep.subr.bf16.mxu0 0
    %99 = vmatpush1.bf16.msra.mxu0 0
    %100 = vmatprep.subr.bf16.mxu0 0
    %101 = vmatpush1.bf16.msra.mxu0 0
    %102 = vmatprep.subr.bf16.mxu0 0
    %103 = vmatpush1.bf16.msra.mxu0 0
    %104 = vmatprep.subr.bf16.mxu0 0
    %105 = vmatpush1.bf16.msra.mxu0 0
    %106 = vmatprep.subr.bf16.mxu0 0
    %107 = vmatpush1.bf16.msra.mxu0 0
    %108 = vmatprep.mubr.bf16.mxu0 0
    %109 = vmatmul.mubr.bf16.gmra.mrb[0].mxu0 %v74
    %v110 = vpop.f32.mrb[0].mxu0
    %v111 = vadd.f32 0.0, %v110
    %v112 = vpop.f32.mrb[0].mxu0
    %v113 = vpop.f32.mrb[0].mxu0
    %v114 = vpop.f32.mrb[0].mxu0
    %115 = vdwg.mxu0
    %v116 = vpack.c.bf16 %v111, %v111
    %v117 = vld [vmem:[#allocation5] sm:$0xf]
    %v118 = vld [vmem:[#allocation5 + $0x4] sm:$0xf]
    %v119 = vlaneseq
    %v120 = vshrl.u32 %v119, 7
    %v121 = vsub.s32 0, %v120
    %v122 = vrot.slane %v61, %v121
    %v125 = vunpack.c.l.b16 %v117
    %v126 = vunpack.c.l.b16 %v118
    %v127 = vpack.c.b16 %v126, %v125
    %v130 = vsel %vm72, %v116, 0
    %132 = vmatprep.subr.bf16.mxu0 0
    %133 = vmatpush1.bf16.msra.mxu0 %v127
    %134 = vmatprep.subr.bf16.mxu0 0
    %135 = vmatpush1.bf16.msra.mxu0 0
    %136 = vmatprep.subr.bf16.mxu0 0
    %137 = vmatpush1.bf16.msra.mxu0 0
    %138 = vmatprep.subr.bf16.mxu0 0
    %139 = vmatpush1.bf16.msra.mxu0 0
    %140 = vmatprep.subr.bf16.mxu0 0
    %141 = vmatpush1.bf16.msra.mxu0 0
    %142 = vmatprep.subr.bf16.mxu0 0
    %143 = vmatpush1.bf16.msra.mxu0 0
    %144 = vmatprep.subr.bf16.mxu0 0
    %145 = vmatpush1.bf16.msra.mxu0 0
    %146 = vmatprep.subr.bf16.mxu0 0
    %147 = vmatpush1.bf16.msra.mxu0 0
    %148 = vmatprep.subr.bf16.mxu0 0
    %149 = vmatpush1.bf16.msra.mxu0 0
    %150 = vmatprep.subr.bf16.mxu0 0
    %151 = vmatpush1.bf16.msra.mxu0 0
    %152 = vmatprep.subr.bf16.mxu0 0
    %153 = vmatpush1.bf16.msra.mxu0 0
    %154 = vmatprep.subr.bf16.mxu0 0
    %155 = vmatpush1.bf16.msra.mxu0 0
    %156 = vmatprep.subr.bf16.mxu0 0
    %157 = vmatpush1.bf16.msra.mxu0 0
    %158 = vmatprep.subr.bf16.mxu0 0
    %159 = vmatpush1.bf16.msra.mxu0 0
    %160 = vmatprep.subr.bf16.mxu0 0
    %161 = vmatpush1.bf16.msra.mxu0 0
    %162 = vmatprep.subr.bf16.mxu0 0
    %163 = vmatpush1.bf16.msra.mxu0 0
    %164 = vmatprep.mubr.bf16.mxu0 0
    %165 = vmatmul.mubr.bf16.gmra.mrb[0].mxu0 %v130
    %v166 = vpop.f32.mrb[0].mxu0
    %v167 = vadd.f32 %v122, %v166
    %v168 = vpop.f32.mrb[0].mxu0
    %v169 = vpop.f32.mrb[0].mxu0
    %v170 = vpop.f32.mrb[0].mxu0
    %171 = vdwg.mxu0
    %v172 = vmax.f32 %v167, 0.0
    %vm173 = vcmask 64512
    %v175 = vsel %vm173, %v57, 0
    %vm177 = vcmask 1043456
    %v179 = vsel %vm177, %v60, 0
    %181 = vmatprep.subr.bf16.mxu0 0
    %182 = vmatpush1.bf16.msra.mxu0 %v179
    %183 = vmatprep.subr.bf16.mxu0 0
    %184 = vmatpush1.bf16.msra.mxu0 0
    %185 = vmatprep.subr.bf16.mxu0 0
    %186 = vmatpush1.bf16.msra.mxu0 0
    %187 = vmatprep.subr.bf16.mxu0 0
    %188 = vmatpush1.bf16.msra.mxu0 0
    %189 = vmatprep.subr.bf16.mxu0 0
    %190 = vmatpush1.bf16.msra.mxu0 0
    %191 = vmatprep.subr.bf16.mxu0 0
    %192 = vmatpush1.bf16.msra.mxu0 0
    %193 = vmatprep.subr.bf16.mxu0 0
    %194 = vmatpush1.bf16.msra.mxu0 0
    %195 = vmatprep.subr.bf16.mxu0 0
    %196 = vmatpush1.bf16.msra.mxu0 0
    %197 = vmatprep.subr.bf16.mxu0 0
    %198 = vmatpush1.bf16.msra.mxu0 0
    %199 = vmatprep.subr.bf16.mxu0 0
    %200 = vmatpush1.bf16.msra.mxu0 0
    %201 = vmatprep.subr.bf16.mxu0 0
    %202 = vmatpush1.bf16.msra.mxu0 0
    %203 = vmatprep.subr.bf16.mxu0 0
    %204 = vmatpush1.bf16.msra.mxu0 0
    %205 = vmatprep.subr.bf16.mxu0 0
    %206 = vmatpush1.bf16.msra.mxu0 0
    %207 = vmatprep.subr.bf16.mxu0 0
    %208 = vmatpush1.bf16.msra.mxu0 0
    %209 = vmatprep.subr.bf16.mxu0 0
    %210 = vmatpush1.bf16.msra.mxu0 0
    %211 = vmatprep.subr.bf16.mxu0 0
    %212 = vmatpush1.bf16.msra.mxu0 0
    %213 = vmatprep.mubr.bf16.mxu0 0
    %214 = vmatmul.mubr.bf16.gmra.mrb[0].mxu0 %v175
    %v215 = vpop.f32.mrb[0].mxu0
    %v216 = vadd.f32 0.0, %v215
    %v217 = vpop.f32.mrb[0].mxu0
    %v218 = vpop.f32.mrb[0].mxu0
    %v219 = vpop.f32.mrb[0].mxu0
    %220 = vdwg.mxu0
    %v221 = vpack.c.bf16 %v216, %v216
    %v222 = vld [vmem:[#allocation5 + $0x8] sm:$0xf]
    %v223 = vlaneseq
    %v224 = vshrl.u32 %v223, 7
    %v225 = vsub.s32 0, %v224
    %v226 = vrot.slane %v62, %v225
    %v228 = vsel %vm173, %v221, 0
    %v231 = vsel %vm177, %v222, 0
    %233 = vmatprep.subr.bf16.mxu0 0
    %234 = vmatpush1.bf16.msra.mxu0 %v231
    %235 = vmatprep.subr.bf16.mxu0 0
    %236 = vmatpush1.bf16.msra.mxu0 0
    %237 = vmatprep.subr.bf16.mxu0 0
    %238 = vmatpush1.bf16.msra.mxu0 0
    %239 = vmatprep.subr.bf16.mxu0 0
    %240 = vmatpush1.bf16.msra.mxu0 0
    %241 = vmatprep.subr.bf16.mxu0 0
    %242 = vmatpush1.bf16.msra.mxu0 0
    %243 = vmatprep.subr.bf16.mxu0 0
    %244 = vmatpush1.bf16.msra.mxu0 0
    %245 = vmatprep.subr.bf16.mxu0 0
    %246 = vmatpush1.bf16.msra.mxu0 0
    %247 = vmatprep.subr.bf16.mxu0 0
    %248 = vmatpush1.bf16.msra.mxu0 0
    %249 = vmatprep.subr.bf16.mxu0 0
    %250 = vmatpush1.bf16.msra.mxu0 0
    %251 = vmatprep.subr.bf16.mxu0 0
    %252 = vmatpush1.bf16.msra.mxu0 0
    %253 = vmatprep.subr.bf16.mxu0 0
    %254 = vmatpush1.bf16.msra.mxu0 0
    %255 = vmatprep.subr.bf16.mxu0 0
    %256 = vmatpush1.bf16.msra.mxu0 0
    %257 = vmatprep.subr.bf16.mxu0 0
    %258 = vmatpush1.bf16.msra.mxu0 0
    %259 = vmatprep.subr.bf16.mxu0 0
    %260 = vmatpush1.bf16.msra.mxu0 0
    %261 = vmatprep.subr.bf16.mxu0 0
    %262 = vmatpush1.bf16.msra.mxu0 0
    %263 = vmatprep.subr.bf16.mxu0 0
    %264 = vmatpush1.bf16.msra.mxu0 0
    %265 = vmatprep.mubr.bf16.mxu0 0
    %266 = vmatmul.mubr.bf16.gmra.mrb[0].mxu0 %v228
    %v267 = vpop.f32.mrb[0].mxu0
    %v268 = vadd.f32 %v226, %v267
    %v269 = vpop.f32.mrb[0].mxu0
    %v270 = vpop.f32.mrb[0].mxu0
    %v271 = vpop.f32.mrb[0].mxu0
    %272 = vdwg.mxu0
    %v273 = vmax.f32 %v268, 0.0
    %v274 = vpack.c.bf16 %v172, %v172
    %v275 = vpack.c.bf16 %v273, %v273
    %v276 = vld [vmem:[#allocation5 + $0xc] sm:$0xf]
    %v277 = vld [vmem:[#allocation5 + $0x10] sm:$0xf]
    %v278 = vld [vmem:[#allocation5 + $0x14] sm:$0xf]
    %v279 = vld [vmem:[#allocation5 + $0x18] sm:$0xf]
    %v280 = vld [vmem:[#allocation5 + $0x1c] sm:$0xf]
    %v281 = vld [vmem:[#allocation5 + $0x20] sm:$0xf]
    %v282 = vld [vmem:[#allocation5 + $0x24] sm:$0xf]
    %v283 = vld [vmem:[#allocation5 + $0x28] sm:$0xf]
    %v284 = vld [vmem:[#allocation5 + $0x2c] sm:$0xf]
    %v285 = vld [vmem:[#allocation5 + $0x30] sm:$0xf]
    %v286 = vld [vmem:[#allocation5 + $0x34] sm:$0xf]
    %v287 = vld [vmem:[#allocation5 + $0x38] sm:$0xf]
    %v288 = vld [vmem:[#allocation5 + $0x3c] sm:$0xf]
    %v289 = vld [vmem:[#allocation5 + $0x40] sm:$0xf]
    %v290 = vld [vmem:[#allocation5 + $0x44] sm:$0xf]
    %v291 = vld [vmem:[#allocation5 + $0x48] sm:$0xf]
    %v308 = vunpack.c.l.b16 %v276
    %v309 = vunpack.c.l.b16 %v277
    %v310 = vunpack.c.l.b16 %v278
    %v311 = vunpack.c.l.b16 %v279
    %v312 = vunpack.c.l.b16 %v280
    %v313 = vunpack.c.l.b16 %v281
    %v314 = vunpack.c.l.b16 %v282
    %v315 = vunpack.c.l.b16 %v283
    %v316 = vunpack.c.l.b16 %v284
    %v317 = vunpack.c.l.b16 %v285
    %v318 = vunpack.c.l.b16 %v286
    %v319 = vunpack.c.l.b16 %v287
    %v320 = vunpack.c.l.b16 %v288
    %v321 = vunpack.c.l.b16 %v289
    %v322 = vunpack.c.l.b16 %v290
    %v323 = vunpack.c.l.b16 %v291
    %v324 = vpack.c.b16 %v309, %v308
    %v325 = vpack.c.b16 %v311, %v310
    %v326 = vpack.c.b16 %v313, %v312
    %v327 = vpack.c.b16 %v315, %v314
    %v328 = vpack.c.b16 %v317, %v316
    %v329 = vpack.c.b16 %v319, %v318
    %v330 = vpack.c.b16 %v321, %v320
    %v331 = vpack.c.b16 %v323, %v322
    %340 = vmatprep.subr.bf16.mxu0 0
    %341 = vmatpush1.bf16.msra.mxu0 %v324
    %342 = vmatprep.subr.bf16.mxu0 0
    %343 = vmatpush1.bf16.msra.mxu0 %v325
    %344 = vmatprep.subr.bf16.mxu0 0
    %345 = vmatpush1.bf16.msra.mxu0 %v326
    %346 = vmatprep.subr.bf16.mxu0 0
    %347 = vmatpush1.bf16.msra.mxu0 %v327
    %348 = vmatprep.subr.bf16.mxu0 0
    %349 = vmatpush1.bf16.msra.mxu0 %v328
    %350 = vmatprep.subr.bf16.mxu0 0
    %351 = vmatpush1.bf16.msra.mxu0 %v329
    %352 = vmatprep.subr.bf16.mxu0 0
    %353 = vmatpush1.bf16.msra.mxu0 %v330
    %354 = vmatprep.subr.bf16.mxu0 0
    %355 = vmatpush1.bf16.msra.mxu0 %v331
    %356 = vmatprep.subr.bf16.mxu0 0
    %357 = vmatpush1.bf16.msra.mxu0 0
    %358 = vmatprep.subr.bf16.mxu0 0
    %359 = vmatpush1.bf16.msra.mxu0 0
    %360 = vmatprep.subr.bf16.mxu0 0
    %361 = vmatpush1.bf16.msra.mxu0 0
    %362 = vmatprep.subr.bf16.mxu0 0
    %363 = vmatpush1.bf16.msra.mxu0 0
    %364 = vmatprep.subr.bf16.mxu0 0
    %365 = vmatpush1.bf16.msra.mxu0 0
    %366 = vmatprep.subr.bf16.mxu0 0
    %367 = vmatpush1.bf16.msra.mxu0 0
    %368 = vmatprep.subr.bf16.mxu0 0
    %369 = vmatpush1.bf16.msra.mxu0 0
    %370 = vmatprep.subr.bf16.mxu0 0
    %371 = vmatpush1.bf16.msra.mxu0 0
    %372 = vmatprep.mubr.bf16.mxu0 0
    %373 = vmatmul.mubr.bf16.gmra.mrb[0].mxu0 %v274
    %v374 = vpop.f32.mrb[0].mxu0
    %v375 = vadd.f32 0.0, %v374
    %v376 = vpop.f32.mrb[0].mxu0
    %v377 = vpop.f32.mrb[0].mxu0
    %v378 = vpop.f32.mrb[0].mxu0
    %379 = vdwg.mxu0
    %v380 = vld [vmem:[#allocation5 + $0x4c] sm:$0xf]
    %v381 = vld [vmem:[#allocation5 + $0x50] sm:$0xf]
    %v382 = vld [vmem:[#allocation5 + $0x54] sm:$0xf]
    %v383 = vld [vmem:[#allocation5 + $0x58] sm:$0xf]
    %v384 = vld [vmem:[#allocation5 + $0x5c] sm:$0xf]
    %v385 = vld [vmem:[#allocation5 + $0x60] sm:$0xf]
    %v386 = vld [vmem:[#allocation5 + $0x64] sm:$0xf]
    %v387 = vld [vmem:[#allocation5 + $0x68] sm:$0xf]
    %v388 = vld [vmem:[#allocation5 + $0x6c] sm:$0xf]
    %v389 = vld [vmem:[#allocation5 + $0x70] sm:$0xf]
    %v390 = vld [vmem:[#allocation5 + $0x74] sm:$0xf]
    %v391 = vld [vmem:[#allocation5 + $0x78] sm:$0xf]
    %v392 = vld [vmem:[#allocation5 + $0x7c] sm:$0xf]
    %v393 = vld [vmem:[#allocation5 + $0x80] sm:$0xf]
    %v394 = vld [vmem:[#allocation5 + $0x84] sm:$0xf]
    %v395 = vld [vmem:[#allocation5 + $0x88] sm:$0xf]
    %v412 = vunpack.c.l.b16 %v380
    %v413 = vunpack.c.l.b16 %v381
    %v414 = vunpack.c.l.b16 %v382
    %v415 = vunpack.c.l.b16 %v383
    %v416 = vunpack.c.l.b16 %v384
    %v417 = vunpack.c.l.b16 %v385
    %v418 = vunpack.c.l.b16 %v386
    %v419 = vunpack.c.l.b16 %v387
    %v420 = vunpack.c.l.b16 %v388
    %v421 = vunpack.c.l.b16 %v389
    %v422 = vunpack.c.l.b16 %v390
    %v423 = vunpack.c.l.b16 %v391
    %v424 = vunpack.c.l.b16 %v392
    %v425 = vunpack.c.l.b16 %v393
    %v426 = vunpack.c.l.b16 %v394
    %v427 = vunpack.c.l.b16 %v395
    %v428 = vpack.c.b16 %v413, %v412
    %v429 = vpack.c.b16 %v415, %v414
    %v430 = vpack.c.b16 %v417, %v416
    %v431 = vpack.c.b16 %v419, %v418
    %v432 = vpack.c.b16 %v421, %v420
    %v433 = vpack.c.b16 %v423, %v422
    %v434 = vpack.c.b16 %v425, %v424
    %v435 = vpack.c.b16 %v427, %v426
    %444 = vmatprep.subr.bf16.mxu0 0
    %445 = vmatpush1.bf16.msra.mxu0 %v428
    %446 = vmatprep.subr.bf16.mxu0 0
    %447 = vmatpush1.bf16.msra.mxu0 %v429
    %448 = vmatprep.subr.bf16.mxu0 0
    %449 = vmatpush1.bf16.msra.mxu0 %v430
    %450 = vmatprep.subr.bf16.mxu0 0
    %451 = vmatpush1.bf16.msra.mxu0 %v431
    %452 = vmatprep.subr.bf16.mxu0 0
    %453 = vmatpush1.bf16.msra.mxu0 %v432
    %454 = vmatprep.subr.bf16.mxu0 0
    %455 = vmatpush1.bf16.msra.mxu0 %v433
    %456 = vmatprep.subr.bf16.mxu0 0
    %457 = vmatpush1.bf16.msra.mxu0 %v434
    %458 = vmatprep.subr.bf16.mxu0 0
    %459 = vmatpush1.bf16.msra.mxu0 %v435
    %460 = vmatprep.subr.bf16.mxu0 0
    %461 = vmatpush1.bf16.msra.mxu0 0
    %462 = vmatprep.subr.bf16.mxu0 0
    %463 = vmatpush1.bf16.msra.mxu0 0
    %464 = vmatprep.subr.bf16.mxu0 0
    %465 = vmatpush1.bf16.msra.mxu0 0
    %466 = vmatprep.subr.bf16.mxu0 0
    %467 = vmatpush1.bf16.msra.mxu0 0
    %468 = vmatprep.subr.bf16.mxu0 0
    %469 = vmatpush1.bf16.msra.mxu0 0
    %470 = vmatprep.subr.bf16.mxu0 0
    %471 = vmatpush1.bf16.msra.mxu0 0
    %472 = vmatprep.subr.bf16.mxu0 0
    %473 = vmatpush1.bf16.msra.mxu0 0
    %474 = vmatprep.subr.bf16.mxu0 0
    %475 = vmatpush1.bf16.msra.mxu0 0
    %476 = vmatprep.mubr.bf16.mxu0 0
    %477 = vmatmul.mubr.bf16.gmra.mrb[0].mxu0 %v275
    %v478 = vpop.f32.mrb[0].mxu0
    %v479 = vadd.f32 0.0, %v478
    %v480 = vpop.f32.mrb[0].mxu0
    %v481 = vpop.f32.mrb[0].mxu0
    %v482 = vpop.f32.mrb[0].mxu0
    %483 = vdwg.mxu0
    %v484 = vpack.c.bf16 %v479, %v375
    %v485 = vlaneseq
    %v486 = vshrl.u32 %v485, 7
    %v487 = vsub.s32 0, %v486
    %v488 = vrot.slane %v63, %v487
    %v490 = vsel %vm72, %v56, 0
    %492 = vmatprep.subr.bf16.mxu0 0
    %493 = vmatpush1.bf16.msra.mxu0 %v484
    %494 = vmatprep.subr.bf16.mxu0 0
    %495 = vmatpush1.bf16.msra.mxu0 0
    %496 = vmatprep.subr.bf16.mxu0 0
    %497 = vmatpush1.bf16.msra.mxu0 0
    %498 = vmatprep.subr.bf16.mxu0 0
    %499 = vmatpush1.bf16.msra.mxu0 0
    %500 = vmatprep.subr.bf16.mxu0 0
    %501 = vmatpush1.bf16.msra.mxu0 0
    %502 = vmatprep.subr.bf16.mxu0 0
    %503 = vmatpush1.bf16.msra.mxu0 0
    %504 = vmatprep.subr.bf16.mxu0 0
    %505 = vmatpush1.bf16.msra.mxu0 0
    %506 = vmatprep.subr.bf16.mxu0 0
    %507 = vmatpush1.bf16.msra.mxu0 0
    %508 = vmatprep.subr.bf16.mxu0 0
    %509 = vmatpush1.bf16.msra.mxu0 0
    %510 = vmatprep.subr.bf16.mxu0 0
    %511 = vmatpush1.bf16.msra.mxu0 0
    %512 = vmatprep.subr.bf16.mxu0 0
    %513 = vmatpush1.bf16.msra.mxu0 0
    %514 = vmatprep.subr.bf16.mxu0 0
    %515 = vmatpush1.bf16.msra.mxu0 0
    %516 = vmatprep.subr.bf16.mxu0 0
    %517 = vmatpush1.bf16.msra.mxu0 0
    %518 = vmatprep.subr.bf16.mxu0 0
    %519 = vmatpush1.bf16.msra.mxu0 0
    %520 = vmatprep.subr.bf16.mxu0 0
    %521 = vmatpush1.bf16.msra.mxu0 0
    %522 = vmatprep.subr.bf16.mxu0 0
    %523 = vmatpush1.bf16.msra.mxu0 0
    %524 = vmatprep.mubr.bf16.mxu0 0
    %525 = vmatmul.mubr.bf16.gmra.mrb[0].mxu0 %v490
    %v526 = vpop.f32.mrb[0].mxu0
    %v527 = vadd.f32 %v488, %v526
    %v528 = vpop.f32.mrb[0].mxu0
    %v529 = vpop.f32.mrb[0].mxu0
    %v530 = vpop.f32.mrb[0].mxu0
    %531 = vdwg.mxu0
    %v532 = vld [vmem:[#allocation5 + $0x8c] sm:$0xf]
    %v533 = vld [vmem:[#allocation5 + $0x90] sm:$0xf]
    %v534 = vld [vmem:[#allocation5 + $0x94] sm:$0xf]
    %v535 = vld [vmem:[#allocation5 + $0x98] sm:$0xf]
    %v536 = vld [vmem:[#allocation5 + $0x9c] sm:$0xf]
    %v537 = vld [vmem:[#allocation5 + $0xa0] sm:$0xf]
    %v538 = vld [vmem:[#allocation5 + $0xa4] sm:$0xf]
    %v539 = vld [vmem:[#allocation5 + $0xa8] sm:$0xf]
    %v540 = vld [vmem:[#allocation5 + $0xac] sm:$0xf]
    %v541 = vld [vmem:[#allocation5 + $0xb0] sm:$0xf]
    %v542 = vld [vmem:[#allocation5 + $0xb4] sm:$0xf]
    %v543 = vld [vmem:[#allocation5 + $0xb8] sm:$0xf]
    %v544 = vld [vmem:[#allocation5 + $0xbc] sm:$0xf]
    %v545 = vld [vmem:[#allocation5 + $0xc0] sm:$0xf]
    %v546 = vld [vmem:[#allocation5 + $0xc4] sm:$0xf]
    %v547 = vld [vmem:[#allocation5 + $0xc8] sm:$0xf]
    %v564 = vunpack.c.l.b16 %v532
    %v565 = vunpack.c.l.b16 %v533
    %v566 = vunpack.c.l.b16 %v534
    %v567 = vunpack.c.l.b16 %v535
    %v568 = vunpack.c.l.b16 %v536
    %v569 = vunpack.c.l.b16 %v537
    %v570 = vunpack.c.l.b16 %v538
    %v571 = vunpack.c.l.b16 %v539
    %v572 = vunpack.c.l.b16 %v540
    %v573 = vunpack.c.l.b16 %v541
    %v574 = vunpack.c.l.b16 %v542
    %v575 = vunpack.c.l.b16 %v543
    %v576 = vunpack.c.l.b16 %v544
    %v577 = vunpack.c.l.b16 %v545
    %v578 = vunpack.c.l.b16 %v546
    %v579 = vunpack.c.l.b16 %v547
    %v580 = vpack.c.b16 %v565, %v564
    %v581 = vpack.c.b16 %v567, %v566
    %v582 = vpack.c.b16 %v569, %v568
    %v583 = vpack.c.b16 %v571, %v570
    %v584 = vpack.c.b16 %v573, %v572
    %v585 = vpack.c.b16 %v575, %v574
    %v586 = vpack.c.b16 %v577, %v576
    %v587 = vpack.c.b16 %v579, %v578
    %596 = vmatprep.subr.bf16.mxu0 0
    %597 = vmatpush1.bf16.msra.mxu0 %v580
    %598 = vmatprep.subr.bf16.mxu0 0
    %599 = vmatpush1.bf16.msra.mxu0 %v581
    %600 = vmatprep.subr.bf16.mxu0 0
    %601 = vmatpush1.bf16.msra.mxu0 %v582
    %602 = vmatprep.subr.bf16.mxu0 0
    %603 = vmatpush1.bf16.msra.mxu0 %v583
    %604 = vmatprep.subr.bf16.mxu0 0
    %605 = vmatpush1.bf16.msra.mxu0 %v584
    %606 = vmatprep.subr.bf16.mxu0 0
    %607 = vmatpush1.bf16.msra.mxu0 %v585
    %608 = vmatprep.subr.bf16.mxu0 0
    %609 = vmatpush1.bf16.msra.mxu0 %v586
    %610 = vmatprep.subr.bf16.mxu0 0
    %611 = vmatpush1.bf16.msra.mxu0 %v587
    %612 = vmatprep.subr.bf16.mxu0 0
    %613 = vmatpush1.bf16.msra.mxu0 0
    %614 = vmatprep.subr.bf16.mxu0 0
    %615 = vmatpush1.bf16.msra.mxu0 0
    %616 = vmatprep.subr.bf16.mxu0 0
    %617 = vmatpush1.bf16.msra.mxu0 0
    %618 = vmatprep.subr.bf16.mxu0 0
    %619 = vmatpush1.bf16.msra.mxu0 0
    %620 = vmatprep.subr.bf16.mxu0 0
    %621 = vmatpush1.bf16.msra.mxu0 0
    %622 = vmatprep.subr.bf16.mxu0 0
    %623 = vmatpush1.bf16.msra.mxu0 0
    %624 = vmatprep.subr.bf16.mxu0 0
    %625 = vmatpush1.bf16.msra.mxu0 0
    %626 = vmatprep.subr.bf16.mxu0 0
    %627 = vmatpush1.bf16.msra.mxu0 0
    %628 = vmatprep.mubr.bf16.mxu0 0
    %629 = vmatmul.mubr.bf16.gmra.mrb[0].mxu0 %v274
    %v630 = vpop.f32.mrb[0].mxu0
    %v631 = vadd.f32 0.0, %v630
    %v632 = vpop.f32.mrb[0].mxu0
    %v633 = vpop.f32.mrb[0].mxu0
    %v634 = vpop.f32.mrb[0].mxu0
    %635 = vdwg.mxu0
    %v636 = vpack.c.bf16 %v631, %v631
    %v637 = vlaneseq
    %v638 = vshrl.u32 %v637, 7
    %v639 = vsub.s32 0, %v638
    %v640 = vrot.slane %v64, %v639
    %v642 = vsel %vm177, %v636, 0
    %644 = vmatprep.subr.bf16.mxu0 0
    %645 = vmatpush1.bf16.msra.mxu0 %v642
    %646 = vmatprep.subr.bf16.mxu0 0
    %647 = vmatpush1.bf16.msra.mxu0 0
    %648 = vmatprep.subr.bf16.mxu0 0
    %649 = vmatpush1.bf16.msra.mxu0 0
    %650 = vmatprep.subr.bf16.mxu0 0
    %651 = vmatpush1.bf16.msra.mxu0 0
    %652 = vmatprep.subr.bf16.mxu0 0
    %653 = vmatpush1.bf16.msra.mxu0 0
    %654 = vmatprep.subr.bf16.mxu0 0
    %655 = vmatpush1.bf16.msra.mxu0 0
    %656 = vmatprep.subr.bf16.mxu0 0
    %657 = vmatpush1.bf16.msra.mxu0 0
    %658 = vmatprep.subr.bf16.mxu0 0
    %659 = vmatpush1.bf16.msra.mxu0 0
    %660 = vmatprep.subr.bf16.mxu0 0
    %661 = vmatpush1.bf16.msra.mxu0 0
    %662 = vmatprep.subr.bf16.mxu0 0
    %663 = vmatpush1.bf16.msra.mxu0 0
    %664 = vmatprep.subr.bf16.mxu0 0
    %665 = vmatpush1.bf16.msra.mxu0 0
    %666 = vmatprep.subr.bf16.mxu0 0
    %667 = vmatpush1.bf16.msra.mxu0 0
    %668 = vmatprep.subr.bf16.mxu0 0
    %669 = vmatpush1.bf16.msra.mxu0 0
    %670 = vmatprep.subr.bf16.mxu0 0
    %671 = vmatpush1.bf16.msra.mxu0 0
    %672 = vmatprep.subr.bf16.mxu0 0
    %673 = vmatpush1.bf16.msra.mxu0 0
    %674 = vmatprep.subr.bf16.mxu0 0
    %675 = vmatpush1.bf16.msra.mxu0 0
    %676 = vmatprep.mubr.bf16.mxu0 0
    %677 = vmatmul.mubr.bf16.gmra.mrb[0].mxu0 %v175
    %v678 = vpop.f32.mrb[0].mxu0
    %v679 = vadd.f32 %v640, %v678
    %v680 = vpop.f32.mrb[0].mxu0
    %v681 = vpop.f32.mrb[0].mxu0
    %v682 = vpop.f32.mrb[0].mxu0
    %683 = vdwg.mxu0
    %vm684 = vcmask 1044480
    %v685 = vsel %vm684, %v527, 0.0
    %v686 = vrot.slane %v685, 4
    %v687 = vadd.f32 %v685, %v686
    %v688 = vrot.slane %v687, 2
    %v689 = vadd.f32 %v687, %v688
    %v690 = vrot.slane %v689, 1
    %v691 = vadd.f32 %v689, %v690
    %vm692 = vcmask 1046528
    %v693 = vsel %vm692, %v679, 0.0
    %v694 = vrot.slane %v693, 4
    %v695 = vadd.f32 %v693, %v694
    %v696 = vrot.slane %v695, 2
    %v697 = vadd.f32 %v695, %v696
    %v698 = vrot.slane %v697, 1
    %v699 = vadd.f32 %v697, %v698
    %v700 = vadd.f32 %v691, %v699
    %v701 = vpack.c.bf16 %v700, %v700
    %v702 = vld [vmem:[#allocation5 + $0xcc] sm:$0xf]
    %v703 = vld [vmem:[#allocation5 + $0xd0] sm:$0xf]
    %v704 = vld [vmem:[#allocation5 + $0xd4] sm:$0xf]
    %v705 = vld [vmem:[#allocation5 + $0xd8] sm:$0xf]
    %v706 = vld [vmem:[#allocation5 + $0xdc] sm:$0xf]
    %v707 = vld [vmem:[#allocation5 + $0xe0] sm:$0xf]
    %v708 = vld [vmem:[#allocation5 + $0xe4] sm:$0xf]
    %v709 = vld [vmem:[#allocation5 + $0xe8] sm:$0xf]
    %v710 = vld [vmem:[#allocation5 + $0xec] sm:$0xf]
    %v711 = vld [vmem:[#allocation5 + $0xf0] sm:$0xf]
    %v712 = vld [vmem:[#allocation5 + $0xf4] sm:$0xf]
    %v713 = vld [vmem:[#allocation5 + $0xf8] sm:$0xf]
    %v714 = vld [vmem:[#allocation5 + $0xfc] sm:$0xf]
    %v715 = vld [vmem:[#allocation5 + $0x100] sm:$0xf]
    %v716 = vld [vmem:[#allocation5 + $0x104] sm:$0xf]
    %v717 = vld [vmem:[#allocation5 + $0x108] sm:$0xf]
    %v734 = vunpack.c.l.b16 %v702
    %v735 = vunpack.c.l.b16 %v703
    %v736 = vunpack.c.l.b16 %v704
    %v737 = vunpack.c.l.b16 %v705
    %v738 = vunpack.c.l.b16 %v706
    %v739 = vunpack.c.l.b16 %v707
    %v740 = vunpack.c.l.b16 %v708
    %v741 = vunpack.c.l.b16 %v709
    %v742 = vunpack.c.l.b16 %v710
    %v743 = vunpack.c.l.b16 %v711
    %v744 = vunpack.c.l.b16 %v712
    %v745 = vunpack.c.l.b16 %v713
    %v746 = vunpack.c.l.b16 %v714
    %v747 = vunpack.c.l.b16 %v715
    %v748 = vunpack.c.l.b16 %v716
    %v749 = vunpack.c.l.b16 %v717
    %v750 = vpack.c.b16 %v735, %v734
    %v751 = vpack.c.b16 %v737, %v736
    %v752 = vpack.c.b16 %v739, %v738
    %v753 = vpack.c.b16 %v741, %v740
    %v754 = vpack.c.b16 %v743, %v742
    %v755 = vpack.c.b16 %v745, %v744
    %v756 = vpack.c.b16 %v747, %v746
    %v757 = vpack.c.b16 %v749, %v748
    %766 = vmatprep.subr.bf16.mxu0 0
    %767 = vmatpush1.bf16.msra.mxu0 %v750
    %768 = vmatprep.subr.bf16.mxu0 0
    %769 = vmatpush1.bf16.msra.mxu0 %v751
    %770 = vmatprep.subr.bf16.mxu0 0
    %771 = vmatpush1.bf16.msra.mxu0 %v752
    %772 = vmatprep.subr.bf16.mxu0 0
    %773 = vmatpush1.bf16.msra.mxu0 %v753
    %774 = vmatprep.subr.bf16.mxu0 0
    %775 = vmatpush1.bf16.msra.mxu0 %v754
    %776 = vmatprep.subr.bf16.mxu0 0
    %777 = vmatpush1.bf16.msra.mxu0 %v755
    %778 = vmatprep.subr.bf16.mxu0 0
    %779 = vmatpush1.bf16.msra.mxu0 %v756
    %780 = vmatprep.subr.bf16.mxu0 0
    %781 = vmatpush1.bf16.msra.mxu0 %v757
    %782 = vmatprep.subr.bf16.mxu0 0
    %783 = vmatpush1.bf16.msra.mxu0 0
    %784 = vmatprep.subr.bf16.mxu0 0
    %785 = vmatpush1.bf16.msra.mxu0 0
    %786 = vmatprep.subr.bf16.mxu0 0
    %787 = vmatpush1.bf16.msra.mxu0 0
    %788 = vmatprep.subr.bf16.mxu0 0
    %789 = vmatpush1.bf16.msra.mxu0 0
    %790 = vmatprep.subr.bf16.mxu0 0
    %791 = vmatpush1.bf16.msra.mxu0 0
    %792 = vmatprep.subr.bf16.mxu0 0
    %793 = vmatpush1.bf16.msra.mxu0 0
    %794 = vmatprep.subr.bf16.mxu0 0
    %795 = vmatpush1.bf16.msra.mxu0 0
    %796 = vmatprep.subr.bf16.mxu0 0
    %797 = vmatpush1.bf16.msra.mxu0 0
    %798 = vmatprep.mubr.bf16.mxu0 0
    %799 = vmatmul.mubr.bf16.gmra.mrb[0].mxu0 %v701
    %v800 = vpop.f32.mrb[0].mxu0
    %v801 = vadd.f32 %v65, %v800
    %v802 = vpop.f32.mrb[0].mxu0
    %v803 = vpop.f32.mrb[0].mxu0
    %v804 = vpop.f32.mrb[0].mxu0
    %805 = vdwg.mxu0
    %806 = vst [vmem:[#allocation8] sm:$0x1] %v801
    // Predicated region
    $region26: #{tpu_custom_call.1} parent=1 // pred_check
      _
    $region27: #{tpu_custom_call.1} parent=1 // pred_check_branch
      %808 = sbr.rel (0) target = $region29
    $region28: #{tpu_custom_call.1} parent=1 // pred_region
      %s810 = ssub.s32 16, 16
      %811 = vsyncadd [#allocation4], %s810
      %s813 = sshll.u32 [#allocation8], 4
      %s814 = int_to_ptr.vmem [resolvable:$true] %s813
      %816 = dma.vmem_to_hbm [thread:$0]  %s814, 16, %s3, [#allocation4]
    $region29: #{tpu_custom_call.1} parent=1 // pred_fallthru
      _
    // Predicated region
    $region30: #{tpu_custom_call.1} parent=1 // pred_check
      _
    $region31: #{tpu_custom_call.1} parent=1 // pred_check_branch
      %818 = sbr.rel (0) target = $region33
    $region32: #{tpu_custom_call.1} parent=1 // pred_region
      %819 = dma.done [#allocation4], 16
    $region33: #{tpu_custom_call.1} parent=1 // pred_fallthru
      _
    %820 = vsyncpa [#allocation3], 1
    %821 = vsyncpa [#allocation6], 1
    %822 = vsyncpa [#allocation4], 1

</llo_original>
